<compile_context>
chip_gen: v7x
topology: tpu7x:2x2x1
jax: 0.10.0
libtpu: 0.0.40
codegen_flags: <defaults>
</compile_context>

<pallas_src>
import math

import jax
import jax.numpy as jnp
from jax import lax
from jax.experimental import pallas as pl
from jax.experimental.pallas import tpu as pltpu


def _attention_kernel(xq_ref, xfull_ref, wq_ref, wkv_ref, wf_ref, b_ref,
                      o_ref, k_scr, v_scr):
    # xq_ref:    (1, TQ, C) query-tile tokens (f32)
    # xfull_ref: (1, S,  C) full token slab for this batch element (f32)
    # wq_ref:    (C, C)   pre-transposed query weight (bf16)
    # wkv_ref:   (C, 2C)  pre-transposed fused [key | value] weight (bf16)
    # wf_ref:    (C, C)   pre-transposed final weight (bf16)
    # b_ref:     (1, 4C)  packed biases [bq | bk | bv | bf] (f32)
    # k_scr/v_scr: (S, C) bf16 scratch holding projected keys / values
    c = wq_ref.shape[0]
    scale = 1.0 / math.sqrt(c)

    # Project K/V once per batch element (first query tile), reuse afterwards.
    @pl.when(pl.program_id(1) == 0)
    def _project_kv():
        xf = xfull_ref[0].astype(jnp.bfloat16)                       # (S, C)
        kv = jnp.dot(xf, wkv_ref[...],
                     preferred_element_type=jnp.float32)             # (S, 2C)
        kv = kv + b_ref[:, c:3 * c]                                  # [bk | bv]
        k_scr[...] = kv[:, :c].astype(jnp.bfloat16)
        v_scr[...] = kv[:, c:].astype(jnp.bfloat16)

    xq = xq_ref[0]                                                   # (TQ, C) f32
    q = jnp.dot(xq.astype(jnp.bfloat16), wq_ref[...],
                preferred_element_type=jnp.float32) + b_ref[:, :c]
    # Fold the 1/sqrt(C) scale into q (TQ*C mults instead of TQ*S).
    q = (q * scale).astype(jnp.bfloat16)

    # scores[t, s] = q[t, :] . k[s, :]  (contract channel axes; no k transpose)
    scores = lax.dot_general(q, k_scr[...],
                             (((1,), (1,)), ((), ())),
                             preferred_element_type=jnp.float32)     # (TQ, S)

    # Numerically stable softmax; normalization deferred until after p @ v.
    m = jnp.max(scores, axis=-1, keepdims=True)
    p = jnp.exp(scores - m)
    denom = jnp.sum(p, axis=-1, keepdims=True)

    a = jnp.dot(p.astype(jnp.bfloat16), v_scr[...],
                preferred_element_type=jnp.float32)                  # (TQ, C)
    a = a * pl.reciprocal(denom, approx=True)

    out = jnp.dot(a.astype(jnp.bfloat16), wf_ref[...],
                  preferred_element_type=jnp.float32) + b_ref[:, 3 * c:]
    o_ref[0] = (out + xq).astype(o_ref.dtype)


def _pick_query_tile(s):
    """Largest query tile <= 256 that divides S (multiple of 8), else full S."""
    for tq in (256, 128, 64, 32, 16, 8):
        if s % tq == 0:
            return tq
    return s


def attention_pallas(x_nchw, params):
    """x_nchw: (B, C, H, W) float32; params: dict of nn.Linear weights/biases."""
    b, c, h, w = x_nchw.shape
    s = h * w

    # Flatten spatial and move channels last: (B, S, C)
    xt = jnp.transpose(x_nchw.reshape(b, c, s), (0, 2, 1))

    # Pre-transpose weights (nn.Linear computes x @ W.T) and fuse K|V; bf16 operands.
    wq_t = params["w3"].T.astype(jnp.bfloat16)                         # query
    wkv_t = jnp.concatenate([params["w1"].T, params["w2"].T],
                            axis=1).astype(jnp.bfloat16)               # key | value
    wf_t = params["wf"].T.astype(jnp.bfloat16)
    biases = jnp.concatenate(
        [params["b3"], params["b1"], params["b2"], params["bf"]]
    ).reshape(1, 4 * c).astype(jnp.float32)                            # [bq|bk|bv|bf]

    tq = _pick_query_tile(s)
    nq = s // tq

    weight_spec = lambda shape: pl.BlockSpec(shape, lambda bi, qi: (0, 0))
    qtile_spec = pl.BlockSpec((1, tq, c), lambda bi, qi: (bi, qi, 0))
    full_spec = pl.BlockSpec((1, s, c), lambda bi, qi: (bi, 0, 0))

    out = pl.pallas_call(
        _attention_kernel,
        out_shape=jax.ShapeDtypeStruct((b, s, c), xt.dtype),
        grid_spec=pltpu.PrefetchScalarGridSpec(
            num_scalar_prefetch=0,
            grid=(b, nq),
            in_specs=[
                qtile_spec,                  # x (query tile / residual)
                full_spec,                   # x (full slab for K/V projection)
                weight_spec((c, c)),         # Wq^T
                weight_spec((c, 2 * c)),     # [Wk^T | Wv^T]
                weight_spec((c, c)),         # Wf^T
                weight_spec((1, 4 * c)),     # packed biases
            ],
            out_specs=qtile_spec,
            scratch_shapes=[
                pltpu.VMEM((s, c), jnp.bfloat16),   # K scratch
                pltpu.VMEM((s, c), jnp.bfloat16),   # V scratch
            ],
        ),
        compiler_params=pltpu.CompilerParams(
            dimension_semantics=("parallel", "arbitrary"),
            vmem_limit_bytes=32 * 1024 * 1024,
        ),
    )(xt, xt, wq_t, wkv_t, wf_t, biases)

    # Back to NCHW.
    return jnp.transpose(out, (0, 2, 1)).reshape(b, c, h, w)


def init_params(key, c):
    """Deterministic init matching nn.Linear(c, c) shapes: W (c, c), b (c,)."""
    ks = jax.random.split(key, 8)
    bound = 1.0 / math.sqrt(c)

    def lin(kw, kb):
        wgt = jax.random.uniform(kw, (c, c), jnp.float32, -bound, bound)
        bias = jax.random.uniform(kb, (c,), jnp.float32, -bound, bound)
        return wgt, bias

    w1, b1 = lin(ks[0], ks[1])
    w2, b2 = lin(ks[2], ks[3])
    w3, b3 = lin(ks[4], ks[5])
    wf, bf = lin(ks[6], ks[7])
    return dict(w1=w1, b1=b1, w2=w2, b2=b2, w3=w3, b3=b3, wf=wf, bf=bf)


def attention_ref(x_nchw, params):
    """Pure-JAX f32 reference mirroring the PyTorch forward."""
    b, c, h, w = x_nchw.shape
    xt = jnp.transpose(x_nchw.reshape(b, c, h * w), (0, 2, 1))          # (B, S, C)
    key = xt @ params["w1"].T + params["b1"]
    value = xt @ params["w2"].T + params["b2"]
    query = xt @ params["w3"].T + params["b3"]
    scale = 1.0 / math.sqrt(c)
    scores = jnp.einsum("bqc,bkc->bqk", query, key) * scale
    p = jax.nn.softmax(scores, axis=-1)
    a = jnp.einsum("bqk,bkc->bqc", p, value)
    a = a @ params["wf"].T + params["bf"]
    a = jnp.transpose(a, (0, 2, 1)).reshape(b, c, h, w)
    return a + x_nchw


if __name__ == "__main__":
    # Module default is ch=128; (B, C, H, W) = (2, 128, 8, 8) keeps lanes full
    # (C = 128) while staying small (S = 64 tokens).
    B, C, H, W = 2, 128, 8, 8
    key = jax.random.PRNGKey(0)
    kx, kp = jax.random.split(key)
    x = jax.random.normal(kx, (B, C, H, W), jnp.float32)
    params = init_params(kp, C)

    out = attention_pallas(x, params)
    jax.block_until_ready(out)

    ref = attention_ref(x, params)
    assert out.shape == (B, C, H, W)
    # bf16 MXU operands (f32 accumulation) => loosened tolerance vs f32 reference.
    err = float(jnp.max(jnp.abs(out - ref)))
    assert err < 1e-1, f"max abs err {err}"

    print("KERNEL_OK")
</pallas_src>

<mosaic_0001>
module attributes {stable_mosaic.version = 11 : i64} {
  func.func @_attention_kernel(%arg0: i32, %arg1: i32, %arg2: memref<1x64x128xf32, #tpu.memory_space<vmem>>, %arg3: memref<1x64x128xf32, #tpu.memory_space<vmem>>, %arg4: memref<128x128xbf16, #tpu.memory_space<vmem>>, %arg5: memref<128x256xbf16, #tpu.memory_space<vmem>>, %arg6: memref<128x128xbf16, #tpu.memory_space<vmem>>, %arg7: memref<1x512xf32, #tpu.memory_space<vmem>>, %arg8: memref<1x64x128xf32, #tpu.memory_space<vmem>>, %arg9: memref<64x128xbf16, #tpu.memory_space<vmem>>, %arg10: memref<64x128xbf16, #tpu.memory_space<vmem>>) attributes {dimension_semantics = [#tpu.dimension_semantics<parallel>, #tpu.dimension_semantics<arbitrary>], iteration_bounds = array<i64: 2, 1>, scalar_prefetch = 0 : i64, scratch_operands = 2 : i64, tpu.core_type = #tpu.core_type<tc>, window_params = [{transform_indices = @transform_0, window_bounds = array<i64: 1, 64, 128>}, {transform_indices = @transform_1, window_bounds = array<i64: 1, 64, 128>}, {pipeline_mode = #tpu.pipeline_mode<synchronous>, transform_indices = @transform_2, window_bounds = array<i64: 128, 128>}, {pipeline_mode = #tpu.pipeline_mode<synchronous>, transform_indices = @transform_3, window_bounds = array<i64: 128, 256>}, {pipeline_mode = #tpu.pipeline_mode<synchronous>, transform_indices = @transform_4, window_bounds = array<i64: 128, 128>}, {pipeline_mode = #tpu.pipeline_mode<synchronous>, transform_indices = @transform_5, window_bounds = array<i64: 1, 512>}, {transform_indices = @transform_6, window_bounds = array<i64: 1, 64, 128>}]} {
    %c0_i32 = arith.constant 0 : i32
    %0 = arith.cmpi eq, %arg1, %c0_i32 : i32
    %1 = arith.extui %0 : i1 to i32
    %c0_i32_0 = arith.constant 0 : i32
    %2 = arith.cmpi ne, %1, %c0_i32_0 : i32
    scf.if %2 {
      %c0_23 = arith.constant 0 : index
      %c0_24 = arith.constant 0 : index
      %c0_25 = arith.constant 0 : index
      %39 = vector.load %arg3[%c0_23, %c0_24, %c0_25] : memref<1x64x128xf32, #tpu.memory_space<vmem>>, vector<1x64x128xf32>
      %40 = vector.shape_cast %39 : vector<1x64x128xf32> to vector<64x128xf32>
      %41 = arith.truncf %40 : vector<64x128xf32> to vector<64x128xbf16>
      %c0_26 = arith.constant 0 : index
      %c0_27 = arith.constant 0 : index
      %42 = vector.load %arg5[%c0_26, %c0_27] : memref<128x256xbf16, #tpu.memory_space<vmem>>, vector<128x256xbf16>
      %cst_28 = arith.constant dense<0.000000e+00> : vector<64x256xf32>
      %43 = tpu.matmul %41, %42, %cst_28 {dimension_numbers = #tpu.dot_dimension_numbers<[1], [0], [0], [1], [0, 0, 1, 1], [], []>} : vector<64x128xbf16>, vector<128x256xbf16>, vector<64x256xf32> -> vector<64x256xf32>
      %c0_29 = arith.constant 0 : index
      %c128 = arith.constant 128 : index
      %44 = vector.load %arg7[%c0_29, %c128] : memref<1x512xf32, #tpu.memory_space<vmem>>, vector<1x256xf32>
      %45 = vector.broadcast %44 : vector<1x256xf32> to vector<64x256xf32>
      %46 = arith.addf %43, %45 : vector<64x256xf32>
      %47 = vector.extract_strided_slice %46 {offsets = [0, 0], sizes = [64, 128], strides = [1, 1]} : vector<64x256xf32> to vector<64x128xf32>
      %48 = arith.truncf %47 : vector<64x128xf32> to vector<64x128xbf16>
      %c0_30 = arith.constant 0 : index
      %c0_31 = arith.constant 0 : index
      %49 = vector.load %arg9[%c0_30, %c0_31] : memref<64x128xbf16, #tpu.memory_space<vmem>>, vector<64x128xbf16>
      tpu.vector_store %arg9[%c0_30, %c0_31], %48 {strides = array<i32>} : memref<64x128xbf16, #tpu.memory_space<vmem>>, vector<64x128xbf16>,
      %50 = vector.extract_strided_slice %46 {offsets = [0, 128], sizes = [64, 128], strides = [1, 1]} : vector<64x256xf32> to vector<64x128xf32>
      %51 = arith.truncf %50 : vector<64x128xf32> to vector<64x128xbf16>
      %c0_32 = arith.constant 0 : index
      %c0_33 = arith.constant 0 : index
      %52 = vector.load %arg10[%c0_32, %c0_33] : memref<64x128xbf16, #tpu.memory_space<vmem>>, vector<64x128xbf16>
      tpu.vector_store %arg10[%c0_32, %c0_33], %51 {strides = array<i32>} : memref<64x128xbf16, #tpu.memory_space<vmem>>, vector<64x128xbf16>,
    } else {
    }
    %c0 = arith.constant 0 : index
    %c0_1 = arith.constant 0 : index
    %c0_2 = arith.constant 0 : index
    %3 = vector.load %arg2[%c0, %c0_1, %c0_2] : memref<1x64x128xf32, #tpu.memory_space<vmem>>, vector<1x64x128xf32>
    %4 = vector.shape_cast %3 : vector<1x64x128xf32> to vector<64x128xf32>
    %5 = arith.truncf %4 : vector<64x128xf32> to vector<64x128xbf16>
    %c0_3 = arith.constant 0 : index
    %c0_4 = arith.constant 0 : index
    %6 = vector.load %arg4[%c0_3, %c0_4] : memref<128x128xbf16, #tpu.memory_space<vmem>>, vector<128x128xbf16>
    %cst = arith.constant dense<0.000000e+00> : vector<64x128xf32>
    %7 = tpu.matmul %5, %6, %cst {dimension_numbers = #tpu.dot_dimension_numbers<[1], [0], [0], [1], [0, 0, 1, 1], [], []>} : vector<64x128xbf16>, vector<128x128xbf16>, vector<64x128xf32> -> vector<64x128xf32>
    %c0_5 = arith.constant 0 : index
    %c0_6 = arith.constant 0 : index
    %8 = vector.load %arg7[%c0_5, %c0_6] : memref<1x512xf32, #tpu.memory_space<vmem>>, vector<1x128xf32>
    %9 = vector.broadcast %8 : vector<1x128xf32> to vector<64x128xf32>
    %10 = arith.addf %7, %9 : vector<64x128xf32>
    %cst_7 = arith.constant 0.0883883461 : f32
    %11 = vector.broadcast %cst_7 : f32 to vector<64x128xf32>
    %12 = arith.mulf %10, %11 : vector<64x128xf32>
    %13 = arith.truncf %12 : vector<64x128xf32> to vector<64x128xbf16>
    %c0_8 = arith.constant 0 : index
    %c0_9 = arith.constant 0 : index
    %14 = vector.load %arg9[%c0_8, %c0_9] : memref<64x128xbf16, #tpu.memory_space<vmem>>, vector<64x128xbf16>
    %cst_10 = arith.constant dense<0.000000e+00> : vector<64x64xf32>
    %15 = tpu.matmul %13, %14, %cst_10 {dimension_numbers = #tpu.dot_dimension_numbers<[1], [1], [0], [0], [0, 0, 1, 0], [], []>} : vector<64x128xbf16>, vector<64x128xbf16>, vector<64x64xf32> -> vector<64x64xf32>
    %cst_11 = arith.constant dense<0xFF800000> : vector<64xf32>
    %16 = vector.multi_reduction <maximumf>, %15, %cst_11 [1] : vector<64x64xf32> to vector<64xf32>
    %17 = vector.shape_cast %16 : vector<64xf32> to vector<64x1xf32>
    %18 = vector.broadcast %17 : vector<64x1xf32> to vector<64x64xf32>
    %19 = arith.subf %15, %18 : vector<64x64xf32>
    %20 = math.exp %19 : vector<64x64xf32>
    %cst_12 = arith.constant dense<0.000000e+00> : vector<64xf32>
    %21 = vector.multi_reduction <add>, %20, %cst_12 [1] : vector<64x64xf32> to vector<64xf32>
    %22 = vector.shape_cast %21 : vector<64xf32> to vector<64x1xf32>
    %23 = arith.truncf %20 : vector<64x64xf32> to vector<64x64xbf16>
    %c0_13 = arith.constant 0 : index
    %c0_14 = arith.constant 0 : index
    %24 = vector.load %arg10[%c0_13, %c0_14] : memref<64x128xbf16, #tpu.memory_space<vmem>>, vector<64x128xbf16>
    %cst_15 = arith.constant dense<0.000000e+00> : vector<64x128xf32>
    %25 = tpu.matmul %23, %24, %cst_15 {dimension_numbers = #tpu.dot_dimension_numbers<[1], [0], [0], [1], [0, 0, 1, 1], [], []>} : vector<64x64xbf16>, vector<64x128xbf16>, vector<64x128xf32> -> vector<64x128xf32>
    %26 = tpu.reciprocal %22 {approx = true} : vector<64x1xf32> -> vector<64x1xf32>
    %27 = vector.broadcast %26 : vector<64x1xf32> to vector<64x128xf32>
    %28 = arith.mulf %25, %27 : vector<64x128xf32>
    %29 = arith.truncf %28 : vector<64x128xf32> to vector<64x128xbf16>
    %c0_16 = arith.constant 0 : index
    %c0_17 = arith.constant 0 : index
    %30 = vector.load %arg6[%c0_16, %c0_17] : memref<128x128xbf16, #tpu.memory_space<vmem>>, vector<128x128xbf16>
    %cst_18 = arith.constant dense<0.000000e+00> : vector<64x128xf32>
    %31 = tpu.matmul %29, %30, %cst_18 {dimension_numbers = #tpu.dot_dimension_numbers<[1], [0], [0], [1], [0, 0, 1, 1], [], []>} : vector<64x128xbf16>, vector<128x128xbf16>, vector<64x128xf32> -> vector<64x128xf32>
    %c0_19 = arith.constant 0 : index
    %c384 = arith.constant 384 : index
    %32 = vector.load %arg7[%c0_19, %c384] : memref<1x512xf32, #tpu.memory_space<vmem>>, vector<1x128xf32>
    %33 = vector.broadcast %32 : vector<1x128xf32> to vector<64x128xf32>
    %34 = arith.addf %31, %33 : vector<64x128xf32>
    %35 = arith.addf %34, %4 : vector<64x128xf32>
    %c0_20 = arith.constant 0 : index
    %c0_21 = arith.constant 0 : index
    %c0_22 = arith.constant 0 : index
    %36 = vector.load %arg8[%c0_20, %c0_21, %c0_22] : memref<1x64x128xf32, #tpu.memory_space<vmem>>, vector<1x64x128xf32>
    %37 = vector.shape_cast %36 : vector<1x64x128xf32> to vector<64x128xf32>
    %38 = vector.shape_cast %35 : vector<64x128xf32> to vector<1x64x128xf32>
    tpu.vector_store %arg8[%c0_20, %c0_21, %c0_22], %38 {strides = array<i32>} : memref<1x64x128xf32, #tpu.memory_space<vmem>>, vector<1x64x128xf32>,
    return
  }
  func.func @transform_0(%arg0: i32, %arg1: i32) -> (i32, i32, i32) {
    %c0_i32 = arith.constant 0 : i32
    %c0_i32_0 = arith.constant 0 : i32
    return %arg0, %arg1, %c0_i32 : i32, i32, i32
  }
  func.func @transform_1(%arg0: i32, %arg1: i32) -> (i32, i32, i32) {
    %c0_i32 = arith.constant 0 : i32
    %c0_i32_0 = arith.constant 0 : i32
    %c0_i32_1 = arith.constant 0 : i32
    return %arg0, %c0_i32, %c0_i32_0 : i32, i32, i32
  }
  func.func @transform_2(%arg0: i32, %arg1: i32) -> (i32, i32) {
    %c0_i32 = arith.constant 0 : i32
    %c0_i32_0 = arith.constant 0 : i32
    %c0_i32_1 = arith.constant 0 : i32
    return %c0_i32, %c0_i32_0 : i32, i32
  }
  func.func @transform_3(%arg0: i32, %arg1: i32) -> (i32, i32) {
    %c0_i32 = arith.constant 0 : i32
    %c0_i32_0 = arith.constant 0 : i32
    %c0_i32_1 = arith.constant 0 : i32
    return %c0_i32, %c0_i32_0 : i32, i32
  }
  func.func @transform_4(%arg0: i32, %arg1: i32) -> (i32, i32) {
    %c0_i32 = arith.constant 0 : i32
    %c0_i32_0 = arith.constant 0 : i32
    %c0_i32_1 = arith.constant 0 : i32
    return %c0_i32, %c0_i32_0 : i32, i32
  }
  func.func @transform_5(%arg0: i32, %arg1: i32) -> (i32, i32) {
    %c0_i32 = arith.constant 0 : i32
    %c0_i32_0 = arith.constant 0 : i32
    %c0_i32_1 = arith.constant 0 : i32
    return %c0_i32, %c0_i32_0 : i32, i32
  }
  func.func @transform_6(%arg0: i32, %arg1: i32) -> (i32, i32, i32) {
    %c0_i32 = arith.constant 0 : i32
    %c0_i32_0 = arith.constant 0 : i32
    return %arg0, %arg1, %c0_i32 : i32, i32, i32
  }
}

</mosaic_0001>

<llo_original>
// kernel: tpu_custom_call.1
$region0: #{tpu_custom_call.1}
  #allocation0 [shape = 'u32[]', space=smem, size = 0x4, offset = 0x4, fixed_abs, tag = 'smem constant byte address 0x4 - core index']
  #allocation1 [shape = 'u32[144,128]{1,0:T(1,128)}', space=vmem, size = 0x12000, scoped, tag = 'internal scratch']
  #allocation2 [shape = 'bf16[64,128]{1,0:T(16,128)(2,1)}', space=vmem, size = 0x4000, scoped, tag = 'scratch operand']
  #allocation3 [shape = 'bf16[64,128]{1,0:T(16,128)(2,1)}', space=vmem, size = 0x4000, scoped, tag = 'scratch operand']
  %s0 = inlined_call_operand.hbm [shape: f32[2,64,128], index: 0, kind: input, shape index: {}]
  %s1 = inlined_call_operand.hbm [shape: f32[2,64,128], index: 1, kind: input, shape index: {}]
  %s2 = inlined_call_operand.hbm [shape: bf16[128,128], index: 2, kind: input, shape index: {}]
  %s3 = inlined_call_operand.hbm [shape: bf16[128,256], index: 3, kind: input, shape index: {}]
  %s4 = inlined_call_operand.hbm [shape: bf16[128,128], index: 4, kind: input, shape index: {}]
  %s5 = inlined_call_operand.vmem [shape: f32[1,512], index: 5, kind: input, shape index: {}]
  %s6 = inlined_call_operand.hbm [shape: f32[2,64,128], index: 6, kind: output, shape index: {}]
  %s7 = sld [smem:[#allocation0]]
  $region81: #{tpu_custom_call.1} parent=0
    _
  %s9 = ssub.s32 1, %s7
  %s10 = scalar_select 0, %s9, %s7
  $region1: #{tpu_custom_call.1} parent=0
    #allocation4 [shape = 'u8[65536]{0}', space=vmem, size = 0x10000, scoped, tag = 'input window, operand 0']
    #allocation5 [shape = 's32[2]{0}', space=sflag, size = 0x8, scoped, tag = 'scoped memory for tpu_custom_call.1']
    #allocation6 [shape = 's32[2]{0}', space=sflag, size = 0x8, scoped, tag = 'scoped memory for tpu_custom_call.1']
    #allocation7 [shape = 'u8[65536]{0}', space=vmem, size = 0x10000, scoped, tag = 'input window, operand 1']
    #allocation8 [shape = 's32[2]{0}', space=sflag, size = 0x8, scoped, tag = 'scoped memory for tpu_custom_call.1']
    #allocation9 [shape = 'u8[32768]{0}', space=vmem, size = 0x8000, scoped, tag = 'input window, operand 2, single buffered']
    #allocation10 [shape = 'u8[65536]{0}', space=vmem, size = 0x10000, scoped, tag = 'input window, operand 3, single buffered']
    #allocation11 [shape = 's32[1]{0}', space=sflag, size = 0x4, scoped, tag = 'scoped memory for tpu_custom_call.1']
    #allocation12 [shape = 'u8[32768]{0}', space=vmem, size = 0x8000, scoped, tag = 'input window, operand 4, single buffered']
    #allocation13 [shape = 'u8[65536]{0}', space=vmem, size = 0x10000, scoped, tag = 'output window, operand 0']
    %11 = vsyncpa [#allocation5], 0
    %s12 = scalar_lea.sflag [#allocation5], 1
    %13 = vsyncpa %s12, 0
    %14 = vsyncpa [#allocation8], 0
    %s15 = scalar_lea.sflag [#allocation8], 1
    %16 = vsyncpa %s15, 0
    %17 = vsyncpa [#allocation11], 0
    %18 = vsyncpa [#allocation6], 0
    %s19 = scalar_lea.sflag [#allocation6], 1
    %20 = vsyncpa %s19, 0
    loop: start=0, step=1, limit=4
    $region2: #{tpu_custom_call.1} parent=1 // loop_pre_header
      _
    $region3: #{tpu_custom_call.1} parent=1 // loop_header
      %s22 = sphi 0, %s26
      %p23 = scmp.ge.s32.totalorder %s22, 4
      %s29 = sphi 0, %s41
      %s30 = sphi 0, %s37
      %s31 = sphi 0, %s29
      %s32 = sphi 0, %s30
      %s33 = sphi 0, %s31
      %s34 = sphi 0, %s32
      %s46 = sphi 0, %s48
      %s49 = sphi 0, %s46
      %s50 = sphi 0, %s49
      %s66 = sphi 0, %s50
      %s72 = sphi 0, %s74
      %s75 = sphi 0, %s72
      %s76 = sphi 0, %s75
      %s92 = sphi 0, %s76
      %s96 = sphi 0, %s96
      %s98 = sphi 0, %s96
      %s99 = sphi 0, %s98
      %s113 = sphi 0, %s99
      %s117 = sphi 0, %s117
      %s119 = sphi 0, %s117
      %s120 = sphi 0, %s119
      %s134 = sphi 0, %s120
      %s138 = sphi 0, %s138
      %s140 = sphi 0, %s138
      %s141 = sphi 0, %s140
      %s155 = sphi 0, %s141
      %s159 = sphi 0, %s159
      %s161 = sphi 0, %s159
      %s162 = sphi 0, %s161
      %s176 = sphi 0, %s162
      %s184 = sphi 0, %s186
      %s187 = sphi 0, %s184
      %s188 = sphi 0, %s187
      %s204 = sphi 0, %s188
    $region4: #{tpu_custom_call.1} parent=1 // loop_header_branch
      %25 = sbr.rel (%p23) target = $region8
    $region5: #{tpu_custom_call.1} parent=1 // loop_body
      %s27 = ssub.s32 %s22, 1
      %s28 = ssub.s32 %s22, 2
      %s35 = sadd.s32 1, %s30
      %p36 = scmp.ge.s32.totalorder %s35, 1
      %s37 = scalar_select %p36, 0, %s35
      %s38 = sadd.s32 1, %s29
      %s39 = scalar_select %p36, %s38, %s29
      %p40 = scmp.ge.s32.totalorder %s39, 2
      %s41 = scalar_select %p40, 0, %s39
      %s42 = ssub.s32 %s29, %s41
      %s43 = ssub.s32 %s30, %s37
      %s44 = sor.u32 %s42, %s43
      %p45 = scmp.eq.s32.totalorder %s44, 0
      %s47 = sadd.s32 %s46, 1
      %s48 = scalar_select %p45, %s46, %s47
      %p51 = pneg %p45
      %p52 = scmp.eq.s32.totalorder %s22, 1
      %p53 = por %p51, %p52
      %p54 = scmp.ne.s32.totalorder %s46, %s49
      %p55 = scmp.eq.s32.totalorder %s22, 0
      %p56 = por %p54, %p55
      %p57 = scmp.ne.s32.totalorder %s46, %s49
      %p58 = scmp.eq.s32.totalorder %s27, 1
      %p59 = por %p57, %p58
      %p60 = scmp.ne.s32.totalorder %s49, %s50
      %p61 = scmp.eq.s32.totalorder %s27, 0
      %p62 = por %p60, %p61
      %p63 = scmp.ne.s32.totalorder %s49, %s50
      %p64 = scmp.eq.s32.totalorder %s28, 1
      %p65 = por %p63, %p64
      %p67 = scmp.ne.s32.totalorder %s50, %s66
      %p68 = scmp.eq.s32.totalorder %s28, 0
      %p69 = por %p67, %p68
      %s70 = ssub.s32 %s29, %s41
      %p71 = scmp.eq.s32.totalorder %s70, 0
      %s73 = sadd.s32 %s72, 1
      %s74 = scalar_select %p71, %s72, %s73
      %p77 = pneg %p71
      %p78 = scmp.eq.s32.totalorder %s22, 1
      %p79 = por %p77, %p78
      %p80 = scmp.ne.s32.totalorder %s72, %s75
      %p81 = scmp.eq.s32.totalorder %s22, 0
      %p82 = por %p80, %p81
      %p83 = scmp.ne.s32.totalorder %s72, %s75
      %p84 = scmp.eq.s32.totalorder %s27, 1
      %p85 = por %p83, %p84
      %p86 = scmp.ne.s32.totalorder %s75, %s76
      %p87 = scmp.eq.s32.totalorder %s27, 0
      %p88 = por %p86, %p87
      %p89 = scmp.ne.s32.totalorder %s75, %s76
      %p90 = scmp.eq.s32.totalorder %s28, 1
      %p91 = por %p89, %p90
      %p93 = scmp.ne.s32.totalorder %s76, %s92
      %p94 = scmp.eq.s32.totalorder %s28, 0
      %p95 = por %p93, %p94
      %s97 = sadd.s32 %s96, 1
      %p100 = scmp.eq.s32.totalorder %s22, 1
      %p101 = scmp.ne.s32.totalorder %s96, %s98
      %p102 = scmp.eq.s32.totalorder %s22, 0
      %p103 = por %p101, %p102
      %p104 = scmp.ne.s32.totalorder %s96, %s98
      %p105 = scmp.eq.s32.totalorder %s27, 1
      %p106 = por %p104, %p105
      %p107 = scmp.ne.s32.totalorder %s98, %s99
      %p108 = scmp.eq.s32.totalorder %s27, 0
      %p109 = por %p107, %p108
      %p110 = scmp.ne.s32.totalorder %s98, %s99
      %p111 = scmp.eq.s32.totalorder %s28, 1
      %p112 = por %p110, %p111
      %p114 = scmp.ne.s32.totalorder %s99, %s113
      %p115 = scmp.eq.s32.totalorder %s28, 0
      %p116 = por %p114, %p115
      %s118 = sadd.s32 %s117, 1
      %p121 = scmp.eq.s32.totalorder %s22, 1
      %p122 = scmp.ne.s32.totalorder %s117, %s119
      %p123 = scmp.eq.s32.totalorder %s22, 0
      %p124 = por %p122, %p123
      %p125 = scmp.ne.s32.totalorder %s117, %s119
      %p126 = scmp.eq.s32.totalorder %s27, 1
      %p127 = por %p125, %p126
      %p128 = scmp.ne.s32.totalorder %s119, %s120
      %p129 = scmp.eq.s32.totalorder %s27, 0
      %p130 = por %p128, %p129
      %p131 = scmp.ne.s32.totalorder %s119, %s120
      %p132 = scmp.eq.s32.totalorder %s28, 1
      %p133 = por %p131, %p132
      %p135 = scmp.ne.s32.totalorder %s120, %s134
      %p136 = scmp.eq.s32.totalorder %s28, 0
      %p137 = por %p135, %p136
      %s139 = sadd.s32 %s138, 1
      %p142 = scmp.eq.s32.totalorder %s22, 1
      %p143 = scmp.ne.s32.totalorder %s138, %s140
      %p144 = scmp.eq.s32.totalorder %s22, 0
      %p145 = por %p143, %p144
      %p146 = scmp.ne.s32.totalorder %s138, %s140
      %p147 = scmp.eq.s32.totalorder %s27, 1
      %p148 = por %p146, %p147
      %p149 = scmp.ne.s32.totalorder %s140, %s141
      %p150 = scmp.eq.s32.totalorder %s27, 0
      %p151 = por %p149, %p150
      %p152 = scmp.ne.s32.totalorder %s140, %s141
      %p153 = scmp.eq.s32.totalorder %s28, 1
      %p154 = por %p152, %p153
      %p156 = scmp.ne.s32.totalorder %s141, %s155
      %p157 = scmp.eq.s32.totalorder %s28, 0
      %p158 = por %p156, %p157
      %s160 = sadd.s32 %s159, 1
      %p163 = scmp.eq.s32.totalorder %s22, 1
      %p164 = scmp.ne.s32.totalorder %s159, %s161
      %p165 = scmp.eq.s32.totalorder %s22, 0
      %p166 = por %p164, %p165
      %p167 = scmp.ne.s32.totalorder %s159, %s161
      %p168 = scmp.eq.s32.totalorder %s27, 1
      %p169 = por %p167, %p168
      %p170 = scmp.ne.s32.totalorder %s161, %s162
      %p171 = scmp.eq.s32.totalorder %s27, 0
      %p172 = por %p170, %p171
      %p173 = scmp.ne.s32.totalorder %s161, %s162
      %p174 = scmp.eq.s32.totalorder %s28, 1
      %p175 = por %p173, %p174
      %p177 = scmp.ne.s32.totalorder %s162, %s176
      %p178 = scmp.eq.s32.totalorder %s28, 0
      %p179 = por %p177, %p178
      %s180 = ssub.s32 %s29, %s41
      %s181 = ssub.s32 %s30, %s37
      %s182 = sor.u32 %s180, %s181
      %p183 = scmp.eq.s32.totalorder %s182, 0
      %s185 = sadd.s32 %s184, 1
      %s186 = scalar_select %p183, %s184, %s185
      %p189 = pneg %p183
      %p190 = scmp.eq.s32.totalorder %s22, 1
      %p191 = por %p189, %p190
      %p192 = scmp.ne.s32.totalorder %s184, %s187
      %p193 = scmp.eq.s32.totalorder %s22, 0
      %p194 = por %p192, %p193
      %p195 = scmp.ne.s32.totalorder %s184, %s187
      %p196 = scmp.eq.s32.totalorder %s27, 1
      %p197 = por %p195, %p196
      %p198 = scmp.ne.s32.totalorder %s187, %s188
      %p199 = scmp.eq.s32.totalorder %s27, 0
      %p200 = por %p198, %p199
      %p201 = scmp.ne.s32.totalorder %s187, %s188
      %p202 = scmp.eq.s32.totalorder %s28, 1
      %p203 = por %p201, %p202
      %p205 = scmp.ne.s32.totalorder %s188, %s204
      %p206 = scmp.eq.s32.totalorder %s28, 0
      %p207 = por %p205, %p206
      %p208 = scmp.le.s32.totalorder 1, %s22
      %p209 = scmp.lt.s32.totalorder %s22, 3
      %p210 = pnand %p208, %p209
      %p211 = pneg %p210
      // Predicated region
      $region9: #{tpu_custom_call.1} parent=5 // pred_check
        _
      $region10: #{tpu_custom_call.1} parent=5 // pred_check_branch
        %213 = sbr.rel (%p210) target = $region12
      $region11: #{tpu_custom_call.1} parent=5 // pred_region
        %s214 = ssub.s32 %s22, 1
        // Predicated region
        $region13: #{tpu_custom_call.1} parent=11 // pred_check
          %p215 = pneg %p109
        $region14: #{tpu_custom_call.1} parent=11 // pred_check_branch
          %217 = sbr.rel (%p215) target = $region16
        $region15: #{tpu_custom_call.1} parent=11 // pred_region
          %s219 = ssub.s32 1024, 1024
          %220 = vsyncadd [#allocation8], %s219
          %s221 = sshll.u32 [#allocation9], 4
          %s222 = int_to_ptr.vmem [resolvable:$true] %s221
          %227 = dma.hbm_to_vmem [thread:$0]  %s2, 1024, %s222, [#allocation8], 64, 64, 4
        $region16: #{tpu_custom_call.1} parent=11 // pred_fallthru
          _
        // Predicated region
        $region17: #{tpu_custom_call.1} parent=11 // pred_check
          %p228 = pneg %p130
        $region18: #{tpu_custom_call.1} parent=11 // pred_check_branch
          %230 = sbr.rel (%p228) target = $region20
        $region19: #{tpu_custom_call.1} parent=11 // pred_region
          %s232 = ssub.s32 2048, 2048
          %233 = vsyncadd [#allocation11], %s232
          %s234 = sshll.u32 [#allocation10], 4
          %s235 = int_to_ptr.vmem [resolvable:$true] %s234
          %240 = dma.hbm_to_vmem [thread:$0]  %s3, 2048, %s235, [#allocation11], 128, 128, 8
        $region20: #{tpu_custom_call.1} parent=11 // pred_fallthru
          _
        // Predicated region
        $region21: #{tpu_custom_call.1} parent=11 // pred_check
          %p241 = pneg %p151
        $region22: #{tpu_custom_call.1} parent=11 // pred_check_branch
          %243 = sbr.rel (%p241) target = $region24
        $region23: #{tpu_custom_call.1} parent=11 // pred_region
          %s245 = ssub.s32 1024, 1024
          %246 = vsyncadd [#allocation11], %s245
          %s247 = sshll.u32 [#allocation12], 4
          %s248 = int_to_ptr.vmem [resolvable:$true] %s247
          %253 = dma.hbm_to_vmem [thread:$0]  %s4, 1024, %s248, [#allocation11], 64, 64, 4
        $region24: #{tpu_custom_call.1} parent=11 // pred_fallthru
          _
        // Predicated region
        $region25: #{tpu_custom_call.1} parent=11 // pred_check
          %p254 = pneg %p172
        $region26: #{tpu_custom_call.1} parent=11 // pred_check_branch
          %256 = sbr.rel (%p254) target = $region28
        $region27: #{tpu_custom_call.1} parent=11 // pred_region
          _
        $region28: #{tpu_custom_call.1} parent=11 // pred_fallthru
          _
      $region12: #{tpu_custom_call.1} parent=5 // pred_fallthru
        _
      %p257 = scmp.lt.s32.totalorder %s22, 2
      // Predicated region
      $region29: #{tpu_custom_call.1} parent=5 // pred_check
        %p258 = pneg %p257
      $region30: #{tpu_custom_call.1} parent=5 // pred_check_branch
        %260 = sbr.rel (%p258) target = $region32
      $region31: #{tpu_custom_call.1} parent=5 // pred_region
        // Predicated region
        $region33: #{tpu_custom_call.1} parent=31 // pred_check
          %p261 = pneg %p56
        $region34: #{tpu_custom_call.1} parent=31 // pred_check_branch
          %263 = sbr.rel (%p261) target = $region36
        $region35: #{tpu_custom_call.1} parent=31 // pred_region
          %s264 = sand.u32 %s46, 1
          %s265 = scalar_lea.sflag [#allocation5], %s264
          %s266 = sand.u32 %s46, 1
          %s267 = smul.addr %s266, 64
          %s268 = scalar_lea.vmem [#allocation4], %s267
          %s269 = smul.u32 8, %s30
          %s271 = ssub.s32 1024, 1024
          %272 = vsyncadd %s265, %s271
          %s273 = smul.addr %s29, 8
          %s274 = sadd.s32 %s269, %s273
          %s275 = smul.addr %s274, 128
          %s276 = scalar_lea.hbm %s0, %s275
          %s277 = sshll.u32 %s268, 4
          %s278 = int_to_ptr.vmem [resolvable:$true] %s277
          %283 = dma.hbm_to_vmem [thread:$0]  %s276, 1024, %s278, %s265, 128, 128, 8
        $region36: #{tpu_custom_call.1} parent=31 // pred_fallthru
          _
        // Predicated region
        $region37: #{tpu_custom_call.1} parent=31 // pred_check
          %p284 = pneg %p82
        $region38: #{tpu_custom_call.1} parent=31 // pred_check_branch
          %286 = sbr.rel (%p284) target = $region40
        $region39: #{tpu_custom_call.1} parent=31 // pred_region
          %s287 = sand.u32 %s22, 1
          %s288 = scalar_lea.sflag [#allocation8], %s287
          %s289 = sand.u32 %s72, 1
          %s290 = smul.addr %s289, 64
          %s291 = scalar_lea.vmem [#allocation7], %s290
          %s293 = ssub.s32 1024, 1024
          %294 = vsyncadd %s288, %s293
          %s295 = smul.addr %s29, 8
          %s296 = smul.addr %s295, 128
          %s297 = scalar_lea.hbm %s1, %s296
          %s298 = sshll.u32 %s291, 4
          %s299 = int_to_ptr.vmem [resolvable:$true] %s298
          %304 = dma.hbm_to_vmem [thread:$0]  %s297, 1024, %s299, %s288, 128, 128, 8
        $region40: #{tpu_custom_call.1} parent=31 // pred_fallthru
          _
      $region32: #{tpu_custom_call.1} parent=5 // pred_fallthru
        _
      %p305 = scmp.le.s32.totalorder 1, %s22
      %p306 = scmp.lt.s32.totalorder %s22, 3
      %p307 = pnand %p305, %p306
      %p308 = pneg %p307
      // Predicated region
      $region41: #{tpu_custom_call.1} parent=5 // pred_check
        _
      $region42: #{tpu_custom_call.1} parent=5 // pred_check_branch
        %310 = sbr.rel (%p307) target = $region44
      $region43: #{tpu_custom_call.1} parent=5 // pred_region
        %s311 = ssub.s32 %s22, 1
        %s312 = sand.u32 %s49, 1
        %s313 = scalar_lea.sflag [#allocation5], %s312
        %s314 = sand.u32 %s49, 1
        %s315 = smul.addr %s314, 64
        %s316 = scalar_lea.vmem [#allocation4], %s315
        // Predicated region
        $region45: #{tpu_custom_call.1} parent=43 // pred_check
          %p317 = pneg %p62
        $region46: #{tpu_custom_call.1} parent=43 // pred_check_branch
          %319 = sbr.rel (%p317) target = $region48
        $region47: #{tpu_custom_call.1} parent=43 // pred_region
          %320 = dma.done %s313, 1024
        $region48: #{tpu_custom_call.1} parent=43 // pred_fallthru
          _
        %s321 = sand.u32 %s27, 1
        %s322 = scalar_lea.sflag [#allocation8], %s321
        %s323 = sand.u32 %s75, 1
        %s324 = smul.addr %s323, 64
        %s325 = scalar_lea.vmem [#allocation7], %s324
        // Predicated region
        $region49: #{tpu_custom_call.1} parent=43 // pred_check
          %p326 = pneg %p88
        $region50: #{tpu_custom_call.1} parent=43 // pred_check_branch
          %328 = sbr.rel (%p326) target = $region52
        $region51: #{tpu_custom_call.1} parent=43 // pred_region
          %329 = dma.done %s322, 1024
        $region52: #{tpu_custom_call.1} parent=43 // pred_fallthru
          _
        // Predicated region
        $region53: #{tpu_custom_call.1} parent=43 // pred_check
          %p330 = pneg %p109
        $region54: #{tpu_custom_call.1} parent=43 // pred_check_branch
          %332 = sbr.rel (%p330) target = $region56
        $region55: #{tpu_custom_call.1} parent=43 // pred_region
          %333 = dma.done [#allocation8], 1024
        $region56: #{tpu_custom_call.1} parent=43 // pred_fallthru
          _
        // Predicated region
        $region57: #{tpu_custom_call.1} parent=43 // pred_check
          %p334 = pneg %p130
        $region58: #{tpu_custom_call.1} parent=43 // pred_check_branch
          %336 = sbr.rel (%p334) target = $region60
        $region59: #{tpu_custom_call.1} parent=43 // pred_region
          %337 = dma.done [#allocation11], 2048
        $region60: #{tpu_custom_call.1} parent=43 // pred_fallthru
          _
        // Predicated region
        $region61: #{tpu_custom_call.1} parent=43 // pred_check
          %p338 = pneg %p151
        $region62: #{tpu_custom_call.1} parent=43 // pred_check_branch
          %340 = sbr.rel (%p338) target = $region64
        $region63: #{tpu_custom_call.1} parent=43 // pred_region
          %341 = dma.done [#allocation11], 1024
        $region64: #{tpu_custom_call.1} parent=43 // pred_fallthru
          _
        %s342 = sand.u32 %s49, 1
        %s343 = scalar_lea.sflag [#allocation5], %s342
        %s344 = sand.u32 %s49, 1
        %s345 = smul.addr %s344, 64
        %s346 = scalar_lea.vmem [#allocation4], %s345
        %p347 = pneg %p62
        %p348 = pneg %p59
        %s349 = sand.u32 %s27, 1
        %s350 = scalar_lea.sflag [#allocation8], %s349
        %s351 = sand.u32 %s75, 1
        %s352 = smul.addr %s351, 64
        %s353 = scalar_lea.vmem [#allocation7], %s352
        %p354 = pneg %p88
        %p355 = pneg %p85
        %p356 = pneg %p109
        %p357 = pneg %p106
        %p358 = pneg %p130
        %p359 = pneg %p127
        %p360 = pneg %p151
        %p361 = pneg %p148
        %p362 = pneg %p172
        %p363 = pneg %p169
        %p364 = pneg %p200
        %p365 = pneg %p197
        %s366 = sand.u32 %s187, 1
        %s367 = scalar_lea.sflag [#allocation6], %s366
        %s368 = sand.u32 %s187, 1
        %s369 = smul.addr %s368, 64
        %s370 = scalar_lea.vmem [#allocation13], %s369
        %s371 = smul.u32 8, %s32
        %s372 = smul.u32 8, %s32
        %p374 = scmp.eq.s32.totalorder %s32, 0
        // Predicated region
        $region65: #{tpu_custom_call.1} parent=43 // pred_check
          %p375 = pneg %p374
        $region66: #{tpu_custom_call.1} parent=43 // pred_check_branch
          %377 = sbr.rel (%p375) target = $region68
        $region67: #{tpu_custom_call.1} parent=43 // pred_region
          %v378 = vld [vmem:[%s325] sm:$0xff]
          %v379 = vld [vmem:[%s325 + $0x8] sm:$0xff]
          %v380 = vld [vmem:[%s325 + $0x10] sm:$0xff]
          %v381 = vld [vmem:[%s325 + $0x18] sm:$0xff]
          %v382 = vld [vmem:[%s325 + $0x20] sm:$0xff]
          %v383 = vld [vmem:[%s325 + $0x28] sm:$0xff]
          %v384 = vld [vmem:[%s325 + $0x30] sm:$0xff]
          %v385 = vld [vmem:[%s325 + $0x38] sm:$0xff]
          %v386 = vpack.c.bf16 %v379, %v378
          %v387 = vpack.c.bf16 %v381, %v380
          %v388 = vpack.c.bf16 %v383, %v382
          %v389 = vpack.c.bf16 %v385, %v384
          %v390 = vld [vmem:[#allocation10] sm:$0xff]
          %v391 = vld [vmem:[#allocation10 + $0x8] sm:$0xff]
          %v392 = vld [vmem:[#allocation10 + $0x10] sm:$0xff]
          %v393 = vld [vmem:[#allocation10 + $0x18] sm:$0xff]
          %v394 = vld [vmem:[#allocation10 + $0x20] sm:$0xff]
          %v395 = vld [vmem:[#allocation10 + $0x28] sm:$0xff]
          %v396 = vld [vmem:[#allocation10 + $0x30] sm:$0xff]
          %v397 = vld [vmem:[#allocation10 + $0x38] sm:$0xff]
          %v398 = vld [vmem:[#allocation10 + $0x40] sm:$0xff]
          %v399 = vld [vmem:[#allocation10 + $0x48] sm:$0xff]
          %v400 = vld [vmem:[#allocation10 + $0x50] sm:$0xff]
          %v401 = vld [vmem:[#allocation10 + $0x58] sm:$0xff]
          %v402 = vld [vmem:[#allocation10 + $0x60] sm:$0xff]
          %v403 = vld [vmem:[#allocation10 + $0x68] sm:$0xff]
          %v404 = vld [vmem:[#allocation10 + $0x70] sm:$0xff]
          %v405 = vld [vmem:[#allocation10 + $0x78] sm:$0xff]
          %v406 = vld [vmem:[%s5 + $0x1] sm:$0x3]
          %v408 = vlaneseq
          %v409 = vshrl.u32 %v408, 7
          %v410 = vsub.s32 0, %v409
          %v411 = vrot.slane %v406, %v410
          %v412 = vlaneseq
          %v413 = vshrl.u32 %v412, 7
          %v414 = vsub.s32 1, %v413
          %v415 = vrot.slane %v406, %v414
          %v434 = vunpack.c.l.b16 %v390
          %v435 = vunpack.c.h.b16 %v390
          %v436 = vunpack.c.l.b16 %v391
          %v437 = vunpack.c.h.b16 %v391
          %v438 = vunpack.c.l.b16 %v392
          %v439 = vunpack.c.h.b16 %v392
          %v440 = vunpack.c.l.b16 %v393
          %v441 = vunpack.c.h.b16 %v393
          %v442 = vunpack.c.l.b16 %v394
          %v443 = vunpack.c.h.b16 %v394
          %v444 = vunpack.c.l.b16 %v395
          %v445 = vunpack.c.h.b16 %v395
          %v446 = vunpack.c.l.b16 %v396
          %v447 = vunpack.c.h.b16 %v396
          %v448 = vunpack.c.l.b16 %v397
          %v449 = vunpack.c.h.b16 %v397
          %v450 = vunpack.c.l.b16 %v398
          %v451 = vunpack.c.h.b16 %v398
          %v452 = vunpack.c.l.b16 %v399
          %v453 = vunpack.c.h.b16 %v399
          %v454 = vunpack.c.l.b16 %v400
          %v455 = vunpack.c.h.b16 %v400
          %v456 = vunpack.c.l.b16 %v401
          %v457 = vunpack.c.h.b16 %v401
          %v458 = vunpack.c.l.b16 %v402
          %v459 = vunpack.c.h.b16 %v402
          %v460 = vunpack.c.l.b16 %v403
          %v461 = vunpack.c.h.b16 %v403
          %v462 = vunpack.c.l.b16 %v404
          %v463 = vunpack.c.h.b16 %v404
          %v464 = vunpack.c.l.b16 %v405
          %v465 = vunpack.c.h.b16 %v405
          %v466 = vpack.c.b16 %v436, %v434
          %v467 = vpack.c.b16 %v437, %v435
          %v468 = vpack.c.b16 %v440, %v438
          %v469 = vpack.c.b16 %v441, %v439
          %v470 = vpack.c.b16 %v444, %v442
          %v471 = vpack.c.b16 %v445, %v443
          %v472 = vpack.c.b16 %v448, %v446
          %v473 = vpack.c.b16 %v449, %v447
          %v474 = vpack.c.b16 %v452, %v450
          %v475 = vpack.c.b16 %v453, %v451
          %v476 = vpack.c.b16 %v456, %v454
          %v477 = vpack.c.b16 %v457, %v455
          %v478 = vpack.c.b16 %v460, %v458
          %v479 = vpack.c.b16 %v461, %v459
          %v480 = vpack.c.b16 %v464, %v462
          %v481 = vpack.c.b16 %v465, %v463
          %498 = vmatprep.subr.bf16.mxu0 %v467
          %499 = vmatpush1.bf16.msra.mxu0 %v466
          %500 = vmatprep.subr.bf16.mxu0 %v469
          %501 = vmatpush1.bf16.msra.mxu0 %v468
          %502 = vmatprep.subr.bf16.mxu0 %v471
          %503 = vmatpush1.bf16.msra.mxu0 %v470
          %504 = vmatprep.subr.bf16.mxu0 %v473
          %505 = vmatpush1.bf16.msra.mxu0 %v472
          %506 = vmatprep.subr.bf16.mxu0 %v475
          %507 = vmatpush1.bf16.msra.mxu0 %v474
          %508 = vmatprep.subr.bf16.mxu0 %v477
          %509 = vmatpush1.bf16.msra.mxu0 %v476
          %510 = vmatprep.subr.bf16.mxu0 %v479
          %511 = vmatpush1.bf16.msra.mxu0 %v478
          %512 = vmatprep.subr.bf16.mxu0 %v481
          %513 = vmatpush1.bf16.msra.mxu0 %v480
          %514 = vmatprep.subr.bf16.mxu0 0
          %515 = vmatpush1.bf16.msra.mxu0 0
          %516 = vmatprep.subr.bf16.mxu0 0
          %517 = vmatpush1.bf16.msra.mxu0 0
          %518 = vmatprep.subr.bf16.mxu0 0
          %519 = vmatpush1.bf16.msra.mxu0 0
          %520 = vmatprep.subr.bf16.mxu0 0
          %521 = vmatpush1.bf16.msra.mxu0 0
          %522 = vmatprep.subr.bf16.mxu0 0
          %523 = vmatpush1.bf16.msra.mxu0 0
          %524 = vmatprep.subr.bf16.mxu0 0
          %525 = vmatpush1.bf16.msra.mxu0 0
          %526 = vmatprep.subr.bf16.mxu0 0
          %527 = vmatpush1.bf16.msra.mxu0 0
          %528 = vmatprep.subr.bf16.mxu0 0
          %529 = vmatpush1.bf16.msra.mxu0 0
          %530 = vmatprep.mubr.bf16.mxu0 0
          %531 = vmatmul.mubr.bf16.gmra.mrb[0].mxu0 %v386
          %v532 = vpop.f32.mrb[0].mxu0
          %v533 = vadd.f32 %v411, %v532
          %v534 = vpop.f32.mrb[0].mxu0
          %v535 = vadd.f32 %v415, %v534
          %v536 = vpop.f32.mrb[0].mxu0
          %v537 = vadd.f32 %v411, %v536
          %v538 = vpop.f32.mrb[0].mxu0
          %v539 = vadd.f32 %v415, %v538
          %540 = vmatprep.mubr.bf16.mxu0 0
          %541 = vmatmul.mubr.bf16.gmra.mrb[0].mxu0 %v387
          %v542 = vpop.f32.mrb[0].mxu0
          %v543 = vadd.f32 %v411, %v542
          %v544 = vpop.f32.mrb[0].mxu0
          %v545 = vadd.f32 %v415, %v544
          %v546 = vpop.f32.mrb[0].mxu0
          %v547 = vadd.f32 %v411, %v546
          %v548 = vpop.f32.mrb[0].mxu0
          %v549 = vadd.f32 %v415, %v548
          %550 = vmatprep.mubr.bf16.mxu0 0
          %551 = vmatmul.mubr.bf16.gmra.mrb[0].mxu0 %v388
          %v552 = vpop.f32.mrb[0].mxu0
          %v553 = vadd.f32 %v411, %v552
          %v554 = vpop.f32.mrb[0].mxu0
          %v555 = vadd.f32 %v415, %v554
          %v556 = vpop.f32.mrb[0].mxu0
          %v557 = vadd.f32 %v411, %v556
          %v558 = vpop.f32.mrb[0].mxu0
          %v559 = vadd.f32 %v415, %v558
          %560 = vmatprep.mubr.bf16.mxu0 0
          %561 = vmatmul.mubr.bf16.gmra.mrb[0].mxu0 %v389
          %v562 = vpop.f32.mrb[0].mxu0
          %v563 = vadd.f32 %v411, %v562
          %v564 = vpop.f32.mrb[0].mxu0
          %v565 = vadd.f32 %v415, %v564
          %v566 = vpop.f32.mrb[0].mxu0
          %v567 = vadd.f32 %v411, %v566
          %v568 = vpop.f32.mrb[0].mxu0
          %v569 = vadd.f32 %v415, %v568
          %570 = vdwg.mxu0
          %v571 = vpack.c.bf16 %v537, %v533
          %v572 = vpack.c.bf16 %v547, %v543
          %v573 = vpack.c.bf16 %v557, %v553
          %v574 = vpack.c.bf16 %v567, %v563
          %575 = vst [vmem:[#allocation2] sm:$0xff] %v571
          %576 = vst [vmem:[#allocation2 + $0x8] sm:$0xff] %v572
          %577 = vst [vmem:[#allocation2 + $0x10] sm:$0xff] %v573
          %578 = vst [vmem:[#allocation2 + $0x18] sm:$0xff] %v574
          %v579 = vpack.c.bf16 %v539, %v535
          %v580 = vpack.c.bf16 %v549, %v545
          %v581 = vpack.c.bf16 %v559, %v555
          %v582 = vpack.c.bf16 %v569, %v565
          %583 = vst [vmem:[#allocation3] sm:$0xff] %v579
          %584 = vst [vmem:[#allocation3 + $0x8] sm:$0xff] %v580
          %585 = vst [vmem:[#allocation3 + $0x10] sm:$0xff] %v581
          %586 = vst [vmem:[#allocation3 + $0x18] sm:$0xff] %v582
        $region68: #{tpu_custom_call.1} parent=43 // pred_fallthru
          _
        %v587 = vld [vmem:[%s316] sm:$0xff]
        %v588 = vld [vmem:[%s316 + $0x8] sm:$0xff]
        %v589 = vld [vmem:[%s316 + $0x10] sm:$0xff]
        %v590 = vld [vmem:[%s316 + $0x18] sm:$0xff]
        %v591 = vld [vmem:[%s316 + $0x20] sm:$0xff]
        %v592 = vld [vmem:[%s316 + $0x28] sm:$0xff]
        %v593 = vld [vmem:[%s316 + $0x30] sm:$0xff]
        %v594 = vld [vmem:[%s316 + $0x38] sm:$0xff]
        %v595 = vpack.c.bf16 %v588, %v587
        %v596 = vpack.c.bf16 %v590, %v589
        %v597 = vpack.c.bf16 %v592, %v591
        %v598 = vpack.c.bf16 %v594, %v593
        %v599 = vld [vmem:[#allocation9] sm:$0xf]
        %v600 = vld [vmem:[#allocation9 + $0x4] sm:$0xf]
        %v601 = vld [vmem:[#allocation9 + $0x8] sm:$0xf]
        %v602 = vld [vmem:[#allocation9 + $0xc] sm:$0xf]
        %v603 = vld [vmem:[#allocation9 + $0x10] sm:$0xf]
        %v604 = vld [vmem:[#allocation9 + $0x14] sm:$0xf]
        %v605 = vld [vmem:[#allocation9 + $0x18] sm:$0xf]
        %v606 = vld [vmem:[#allocation9 + $0x1c] sm:$0xf]
        %v607 = vld [vmem:[#allocation9 + $0x20] sm:$0xf]
        %v608 = vld [vmem:[#allocation9 + $0x24] sm:$0xf]
        %v609 = vld [vmem:[#allocation9 + $0x28] sm:$0xf]
        %v610 = vld [vmem:[#allocation9 + $0x2c] sm:$0xf]
        %v611 = vld [vmem:[#allocation9 + $0x30] sm:$0xf]
        %v612 = vld [vmem:[#allocation9 + $0x34] sm:$0xf]
        %v613 = vld [vmem:[#allocation9 + $0x38] sm:$0xf]
        %v614 = vld [vmem:[#allocation9 + $0x3c] sm:$0xf]
        %v615 = vld [vmem:[%s5] sm:$0x1]
        %v617 = vlaneseq
        %v618 = vshrl.u32 %v617, 7
        %v619 = vsub.s32 0, %v618
        %v620 = vrot.slane %v615, %v619
        %v638 = vunpack.c.l.b16 %v599
        %v639 = vunpack.c.l.b16 %v600
        %v640 = vunpack.c.l.b16 %v601
        %v641 = vunpack.c.l.b16 %v602
        %v642 = vunpack.c.l.b16 %v603
        %v643 = vunpack.c.l.b16 %v604
        %v644 = vunpack.c.l.b16 %v605
        %v645 = vunpack.c.l.b16 %v606
        %v646 = vunpack.c.l.b16 %v607
        %v647 = vunpack.c.l.b16 %v608
        %v648 = vunpack.c.l.b16 %v609
        %v649 = vunpack.c.l.b16 %v610
        %v650 = vunpack.c.l.b16 %v611
        %v651 = vunpack.c.l.b16 %v612
        %v652 = vunpack.c.l.b16 %v613
        %v653 = vunpack.c.l.b16 %v614
        %v654 = vpack.c.b16 %v639, %v638
        %v655 = vpack.c.b16 %v641, %v640
        %v656 = vpack.c.b16 %v643, %v642
        %v657 = vpack.c.b16 %v645, %v644
        %v658 = vpack.c.b16 %v647, %v646
        %v659 = vpack.c.b16 %v649, %v648
        %v660 = vpack.c.b16 %v651, %v650
        %v661 = vpack.c.b16 %v653, %v652
        %670 = vmatprep.subr.bf16.mxu0 0
        %671 = vmatpush1.bf16.msra.mxu0 %v654
        %672 = vmatprep.subr.bf16.mxu0 0
        %673 = vmatpush1.bf16.msra.mxu0 %v655
        %674 = vmatprep.subr.bf16.mxu0 0
        %675 = vmatpush1.bf16.msra.mxu0 %v656
        %676 = vmatprep.subr.bf16.mxu0 0
        %677 = vmatpush1.bf16.msra.mxu0 %v657
        %678 = vmatprep.subr.bf16.mxu0 0
        %679 = vmatpush1.bf16.msra.mxu0 %v658
        %680 = vmatprep.subr.bf16.mxu0 0
        %681 = vmatpush1.bf16.msra.mxu0 %v659
        %682 = vmatprep.subr.bf16.mxu0 0
        %683 = vmatpush1.bf16.msra.mxu0 %v660
        %684 = vmatprep.subr.bf16.mxu0 0
        %685 = vmatpush1.bf16.msra.mxu0 %v661
        %686 = vmatprep.subr.bf16.mxu0 0
        %687 = vmatpush1.bf16.msra.mxu0 0
        %688 = vmatprep.subr.bf16.mxu0 0
        %689 = vmatpush1.bf16.msra.mxu0 0
        %690 = vmatprep.subr.bf16.mxu0 0
        %691 = vmatpush1.bf16.msra.mxu0 0
        %692 = vmatprep.subr.bf16.mxu0 0
        %693 = vmatpush1.bf16.msra.mxu0 0
        %694 = vmatprep.subr.bf16.mxu0 0
        %695 = vmatpush1.bf16.msra.mxu0 0
        %696 = vmatprep.subr.bf16.mxu0 0
        %697 = vmatpush1.bf16.msra.mxu0 0
        %698 = vmatprep.subr.bf16.mxu0 0
        %699 = vmatpush1.bf16.msra.mxu0 0
        %700 = vmatprep.subr.bf16.mxu0 0
        %701 = vmatpush1.bf16.msra.mxu0 0
        %702 = vmatprep.mubr.bf16.mxu0 0
        %703 = vmatmul.mubr.bf16.gmra.mrb[0].mxu0 %v595
        %v704 = vpop.f32.mrb[0].mxu0
        %v705 = vadd.f32 %v620, %v704
        %v706 = vpop.f32.mrb[0].mxu0
        %v707 = vpop.f32.mrb[0].mxu0
        %v708 = vadd.f32 %v620, %v707
        %v709 = vpop.f32.mrb[0].mxu0
        %710 = vmatprep.mubr.bf16.mxu0 0
        %711 = vmatmul.mubr.bf16.gmra.mrb[0].mxu0 %v596
        %v712 = vpop.f32.mrb[0].mxu0
        %v713 = vadd.f32 %v620, %v712
        %v714 = vpop.f32.mrb[0].mxu0
        %v715 = vpop.f32.mrb[0].mxu0
        %v716 = vadd.f32 %v620, %v715
        %v717 = vpop.f32.mrb[0].mxu0
        %718 = vmatprep.mubr.bf16.mxu0 0
        %719 = vmatmul.mubr.bf16.gmra.mrb[0].mxu0 %v597
        %v720 = vpop.f32.mrb[0].mxu0
        %v721 = vadd.f32 %v620, %v720
        %v722 = vpop.f32.mrb[0].mxu0
        %v723 = vpop.f32.mrb[0].mxu0
        %v724 = vadd.f32 %v620, %v723
        %v725 = vpop.f32.mrb[0].mxu0
        %726 = vmatprep.mubr.bf16.mxu0 0
        %727 = vmatmul.mubr.bf16.gmra.mrb[0].mxu0 %v598
        %v728 = vpop.f32.mrb[0].mxu0
        %v729 = vadd.f32 %v620, %v728
        %v730 = vpop.f32.mrb[0].mxu0
        %v731 = vpop.f32.mrb[0].mxu0
        %v732 = vadd.f32 %v620, %v731
        %v733 = vpop.f32.mrb[0].mxu0
        %734 = vdwg.mxu0
        %v735 = vmul.f32 %v705, 0.088388346
        %v736 = vmul.f32 %v708, 0.088388346
        %v737 = vmul.f32 %v713, 0.088388346
        %v738 = vmul.f32 %v716, 0.088388346
        %v739 = vmul.f32 %v721, 0.088388346
        %v740 = vmul.f32 %v724, 0.088388346
        %v741 = vmul.f32 %v729, 0.088388346
        %v742 = vmul.f32 %v732, 0.088388346
        %v743 = vpack.c.bf16 %v736, %v735
        %v744 = vpack.c.bf16 %v738, %v737
        %v745 = vpack.c.bf16 %v740, %v739
        %v746 = vpack.c.bf16 %v742, %v741
        %v747 = vld [vmem:[#allocation2] sm:$0xff]
        %v748 = vld [vmem:[#allocation2 + $0x8] sm:$0xff]
        %v749 = vld [vmem:[#allocation2 + $0x10] sm:$0xff]
        %v750 = vld [vmem:[#allocation2 + $0x18] sm:$0xff]
        %751 = vmatprep.subr.bf16.mxu0 0
        %752 = vmatpush1.bf16.xpose.msra.mxu0 %v747
        %753 = vmatprep.subr.bf16.mxu0 0
        %754 = vmatpush1.bf16.xpose.msra.mxu0 %v748
        %755 = vmatprep.subr.bf16.mxu0 0
        %756 = vmatpush1.bf16.xpose.msra.mxu0 %v749
        %757 = vmatprep.subr.bf16.mxu0 0
        %758 = vmatpush1.bf16.xpose.msra.mxu0 %v750
        %759 = vmatprep.subr.bf16.mxu0 0
        %760 = vmatpush1.bf16.xpose.msra.mxu0 0
        %761 = vmatprep.subr.bf16.mxu0 0
        %762 = vmatpush1.bf16.xpose.msra.mxu0 0
        %763 = vmatprep.subr.bf16.mxu0 0
        %764 = vmatpush1.bf16.xpose.msra.mxu0 0
        %765 = vmatprep.subr.bf16.mxu0 0
        %766 = vmatpush1.bf16.xpose.msra.mxu0 0
        %767 = vmatprep.subr.bf16.mxu0 0
        %768 = vmatpush1.bf16.xpose.msra.mxu0 0
        %769 = vmatprep.subr.bf16.mxu0 0
        %770 = vmatpush1.bf16.xpose.msra.mxu0 0
        %771 = vmatprep.subr.bf16.mxu0 0
        %772 = vmatpush1.bf16.xpose.msra.mxu0 0
        %773 = vmatprep.subr.bf16.mxu0 0
        %774 = vmatpush1.bf16.xpose.msra.mxu0 0
        %775 = vmatprep.subr.bf16.mxu0 0
        %776 = vmatpush1.bf16.xpose.msra.mxu0 0
        %777 = vmatprep.subr.bf16.mxu0 0
        %778 = vmatpush1.bf16.xpose.msra.mxu0 0
        %779 = vmatprep.subr.bf16.mxu0 0
        %780 = vmatpush1.bf16.xpose.msra.mxu0 0
        %781 = vmatprep.subr.bf16.mxu0 0
        %782 = vmatpush1.bf16.xpose.msra.mxu0 0
        %783 = vmatprep.mubr.bf16.mxu0 0
        %784 = vmatmul.mubr.bf16.gmra.mrb[0].mxu0 %v743
        %v785 = vpop.f32.mrb[0].mxu0
        %v786 = vadd.f32 0.0, %v785
        %v787 = vpop.f32.mrb[0].mxu0
        %v788 = vpop.f32.mrb[0].mxu0
        %v789 = vadd.f32 0.0, %v788
        %v790 = vpop.f32.mrb[0].mxu0
        %791 = vmatprep.mubr.bf16.mxu0 0
        %792 = vmatmul.mubr.bf16.gmra.mrb[0].mxu0 %v744
        %v793 = vpop.f32.mrb[0].mxu0
        %v794 = vadd.f32 0.0, %v793
        %v795 = vpop.f32.mrb[0].mxu0
        %v796 = vpop.f32.mrb[0].mxu0
        %v797 = vadd.f32 0.0, %v796
        %v798 = vpop.f32.mrb[0].mxu0
        %799 = vmatprep.mubr.bf16.mxu0 0
        %800 = vmatmul.mubr.bf16.gmra.mrb[0].mxu0 %v745
        %v801 = vpop.f32.mrb[0].mxu0
        %v802 = vadd.f32 0.0, %v801
        %v803 = vpop.f32.mrb[0].mxu0
        %v804 = vpop.f32.mrb[0].mxu0
        %v805 = vadd.f32 0.0, %v804
        %v806 = vpop.f32.mrb[0].mxu0
        %807 = vmatprep.mubr.bf16.mxu0 0
        %808 = vmatmul.mubr.bf16.gmra.mrb[0].mxu0 %v746
        %v809 = vpop.f32.mrb[0].mxu0
        %v810 = vadd.f32 0.0, %v809
        %v811 = vpop.f32.mrb[0].mxu0
        %v812 = vpop.f32.mrb[0].mxu0
        %v813 = vadd.f32 0.0, %v812
        %v814 = vpop.f32.mrb[0].mxu0
        %815 = vdwg.mxu0
        %vm816 = vcmask 523264
        %v817 = vsel %vm816, %v786, -inf
        %818 = vmax.xlane.f32.xlu0 %v817
        %v819 = vpop.xlane.xlu0 %818
        %v820 = vsel %vm816, %v789, -inf
        %821 = vmax.xlane.f32.xlu0 %v820
        %v822 = vpop.xlane.xlu0 %821
        %v823 = vsel %vm816, %v794, -inf
        %824 = vmax.xlane.f32.xlu0 %v823
        %v825 = vpop.xlane.xlu0 %824
        %v826 = vsel %vm816, %v797, -inf
        %827 = vmax.xlane.f32.xlu0 %v826
        %v828 = vpop.xlane.xlu0 %827
        %v829 = vsel %vm816, %v802, -inf
        %830 = vmax.xlane.f32.xlu0 %v829
        %v831 = vpop.xlane.xlu0 %830
        %v832 = vsel %vm816, %v805, -inf
        %833 = vmax.xlane.f32.xlu0 %v832
        %v834 = vpop.xlane.xlu0 %833
        %v835 = vsel %vm816, %v810, -inf
        %836 = vmax.xlane.f32.xlu0 %v835
        %v837 = vpop.xlane.xlu0 %836
        %v838 = vsel %vm816, %v813, -inf
        %839 = vmax.xlane.f32.xlu0 %v838
        %v840 = vpop.xlane.xlu0 %839
        %v841 = vsub.f32 %v786, %v819
        %v842 = vsub.f32 %v789, %v822
        %v843 = vsub.f32 %v794, %v825
        %v844 = vsub.f32 %v797, %v828
        %v845 = vsub.f32 %v802, %v831
        %v846 = vsub.f32 %v805, %v834
        %v847 = vsub.f32 %v810, %v837
        %v848 = vsub.f32 %v813, %v840
        %v849 = vmul.f32 %v841, 1.442695
        %v850 = vpow.pop %v849
        %v851 = vmul.f32 %v842, 1.442695
        %v852 = vpow.pop %v851
        %v853 = vmul.f32 %v843, 1.442695
        %v854 = vpow.pop %v853
        %v855 = vmul.f32 %v844, 1.442695
        %v856 = vpow.pop %v855
        %v857 = vmul.f32 %v845, 1.442695
        %v858 = vpow.pop %v857
        %v859 = vmul.f32 %v846, 1.442695
        %v860 = vpow.pop %v859
        %v861 = vmul.f32 %v847, 1.442695
        %v862 = vpow.pop %v861
        %v863 = vmul.f32 %v848, 1.442695
        %v864 = vpow.pop %v863
        %v865 = vsel %vm816, %v850, 0.0
        %866 = vadd.xlane.f32.xlu0 %v865
        %v867 = vpop.xlane.xlu0 %866
        %v868 = vsel %vm816, %v852, 0.0
        %869 = vadd.xlane.f32.xlu0 %v868
        %v870 = vpop.xlane.xlu0 %869
        %v871 = vsel %vm816, %v854, 0.0
        %872 = vadd.xlane.f32.xlu0 %v871
        %v873 = vpop.xlane.xlu0 %872
        %v874 = vsel %vm816, %v856, 0.0
        %875 = vadd.xlane.f32.xlu0 %v874
        %v876 = vpop.xlane.xlu0 %875
        %v877 = vsel %vm816, %v858, 0.0
        %878 = vadd.xlane.f32.xlu0 %v877
        %v879 = vpop.xlane.xlu0 %878
        %v880 = vsel %vm816, %v860, 0.0
        %881 = vadd.xlane.f32.xlu0 %v880
        %v882 = vpop.xlane.xlu0 %881
        %v883 = vsel %vm816, %v862, 0.0
        %884 = vadd.xlane.f32.xlu0 %v883
        %v885 = vpop.xlane.xlu0 %884
        %v886 = vsel %vm816, %v864, 0.0
        %887 = vadd.xlane.f32.xlu0 %v886
        %v888 = vpop.xlane.xlu0 %887
        %v889 = vpack.c.bf16 %v852, %v850
        %v890 = vpack.c.bf16 %v856, %v854
        %v891 = vpack.c.bf16 %v860, %v858
        %v892 = vpack.c.bf16 %v864, %v862
        %v893 = vld [vmem:[#allocation3] sm:$0xff]
        %v894 = vld [vmem:[#allocation3 + $0x8] sm:$0xff]
        %v895 = vld [vmem:[#allocation3 + $0x10] sm:$0xff]
        %v896 = vld [vmem:[#allocation3 + $0x18] sm:$0xff]
        %v898 = vsel %vm816, %v889, 0
        %v901 = vsel %vm816, %v890, 0
        %v904 = vsel %vm816, %v891, 0
        %v907 = vsel %vm816, %v892, 0
        %909 = vmatprep.subr.bf16.mxu0 0
        %910 = vmatpush1.bf16.msra.mxu0 %v893
        %911 = vmatprep.subr.bf16.mxu0 0
        %912 = vmatpush1.bf16.msra.mxu0 %v894
        %913 = vmatprep.subr.bf16.mxu0 0
        %914 = vmatpush1.bf16.msra.mxu0 %v895
        %915 = vmatprep.subr.bf16.mxu0 0
        %916 = vmatpush1.bf16.msra.mxu0 %v896
        %917 = vmatprep.subr.bf16.mxu0 0
        %918 = vmatpush1.bf16.msra.mxu0 0
        %919 = vmatprep.subr.bf16.mxu0 0
        %920 = vmatpush1.bf16.msra.mxu0 0
        %921 = vmatprep.subr.bf16.mxu0 0
        %922 = vmatpush1.bf16.msra.mxu0 0
        %923 = vmatprep.subr.bf16.mxu0 0
        %924 = vmatpush1.bf16.msra.mxu0 0
        %925 = vmatprep.subr.bf16.mxu0 0
        %926 = vmatpush1.bf16.msra.mxu0 0
        %927 = vmatprep.subr.bf16.mxu0 0
        %928 = vmatpush1.bf16.msra.mxu0 0
        %929 = vmatprep.subr.bf16.mxu0 0
        %930 = vmatpush1.bf16.msra.mxu0 0
        %931 = vmatprep.subr.bf16.mxu0 0
        %932 = vmatpush1.bf16.msra.mxu0 0
        %933 = vmatprep.subr.bf16.mxu0 0
        %934 = vmatpush1.bf16.msra.mxu0 0
        %935 = vmatprep.subr.bf16.mxu0 0
        %936 = vmatpush1.bf16.msra.mxu0 0
        %937 = vmatprep.subr.bf16.mxu0 0
        %938 = vmatpush1.bf16.msra.mxu0 0
        %939 = vmatprep.subr.bf16.mxu0 0
        %940 = vmatpush1.bf16.msra.mxu0 0
        %941 = vmatprep.mubr.bf16.mxu0 0
        %942 = vmatmul.mubr.bf16.gmra.mrb[0].mxu0 %v898
        %v943 = vpop.f32.mrb[0].mxu0
        %v944 = vadd.f32 0.0, %v943
        %v945 = vpop.f32.mrb[0].mxu0
        %v946 = vpop.f32.mrb[0].mxu0
        %v947 = vadd.f32 0.0, %v946
        %v948 = vpop.f32.mrb[0].mxu0
        %949 = vmatprep.mubr.bf16.mxu0 0
        %950 = vmatmul.mubr.bf16.gmra.mrb[0].mxu0 %v901
        %v951 = vpop.f32.mrb[0].mxu0
        %v952 = vadd.f32 0.0, %v951
        %v953 = vpop.f32.mrb[0].mxu0
        %v954 = vpop.f32.mrb[0].mxu0
        %v955 = vadd.f32 0.0, %v954
        %v956 = vpop.f32.mrb[0].mxu0
        %957 = vmatprep.mubr.bf16.mxu0 0
        %958 = vmatmul.mubr.bf16.gmra.mrb[0].mxu0 %v904
        %v959 = vpop.f32.mrb[0].mxu0
        %v960 = vadd.f32 0.0, %v959
        %v961 = vpop.f32.mrb[0].mxu0
        %v962 = vpop.f32.mrb[0].mxu0
        %v963 = vadd.f32 0.0, %v962
        %v964 = vpop.f32.mrb[0].mxu0
        %965 = vmatprep.mubr.bf16.mxu0 0
        %966 = vmatmul.mubr.bf16.gmra.mrb[0].mxu0 %v907
        %v967 = vpop.f32.mrb[0].mxu0
        %v968 = vadd.f32 0.0, %v967
        %v969 = vpop.f32.mrb[0].mxu0
        %v970 = vpop.f32.mrb[0].mxu0
        %v971 = vadd.f32 0.0, %v970
        %v972 = vpop.f32.mrb[0].mxu0
        %973 = vdwg.mxu0
        %v974 = vrcp.pop %v867
        %v975 = vrcp.pop %v870
        %v976 = vrcp.pop %v873
        %v977 = vrcp.pop %v876
        %v978 = vrcp.pop %v879
        %v979 = vrcp.pop %v882
        %v980 = vrcp.pop %v885
        %v981 = vrcp.pop %v888
        %v982 = vmul.f32 %v944, %v974
        %v983 = vmul.f32 %v947, %v975
        %v984 = vmul.f32 %v952, %v976
        %v985 = vmul.f32 %v955, %v977
        %v986 = vmul.f32 %v960, %v978
        %v987 = vmul.f32 %v963, %v979
        %v988 = vmul.f32 %v968, %v980
        %v989 = vmul.f32 %v971, %v981
        %v990 = vpack.c.bf16 %v983, %v982
        %v991 = vpack.c.bf16 %v985, %v984
        %v992 = vpack.c.bf16 %v987, %v986
        %v993 = vpack.c.bf16 %v989, %v988
        %v994 = vld [vmem:[#allocation12] sm:$0xf]
        %v995 = vld [vmem:[#allocation12 + $0x4] sm:$0xf]
        %v996 = vld [vmem:[#allocation12 + $0x8] sm:$0xf]
        %v997 = vld [vmem:[#allocation12 + $0xc] sm:$0xf]
        %v998 = vld [vmem:[#allocation12 + $0x10] sm:$0xf]
        %v999 = vld [vmem:[#allocation12 + $0x14] sm:$0xf]
        %v1000 = vld [vmem:[#allocation12 + $0x18] sm:$0xf]
        %v1001 = vld [vmem:[#allocation12 + $0x1c] sm:$0xf]
        %v1002 = vld [vmem:[#allocation12 + $0x20] sm:$0xf]
        %v1003 = vld [vmem:[#allocation12 + $0x24] sm:$0xf]
        %v1004 = vld [vmem:[#allocation12 + $0x28] sm:$0xf]
        %v1005 = vld [vmem:[#allocation12 + $0x2c] sm:$0xf]
        %v1006 = vld [vmem:[#allocation12 + $0x30] sm:$0xf]
        %v1007 = vld [vmem:[#allocation12 + $0x34] sm:$0xf]
        %v1008 = vld [vmem:[#allocation12 + $0x38] sm:$0xf]
        %v1009 = vld [vmem:[#allocation12 + $0x3c] sm:$0xf]
        %v1010 = vld [vmem:[%s5 + $0x3] sm:$0x1]
        %v1012 = vlaneseq
        %v1013 = vshrl.u32 %v1012, 7
        %v1014 = vsub.s32 0, %v1013
        %v1015 = vrot.slane %v1010, %v1014
        %v1033 = vunpack.c.l.b16 %v994
        %v1034 = vunpack.c.l.b16 %v995
        %v1035 = vunpack.c.l.b16 %v996
        %v1036 = vunpack.c.l.b16 %v997
        %v1037 = vunpack.c.l.b16 %v998
        %v1038 = vunpack.c.l.b16 %v999
        %v1039 = vunpack.c.l.b16 %v1000
        %v1040 = vunpack.c.l.b16 %v1001
        %v1041 = vunpack.c.l.b16 %v1002
        %v1042 = vunpack.c.l.b16 %v1003
        %v1043 = vunpack.c.l.b16 %v1004
        %v1044 = vunpack.c.l.b16 %v1005
        %v1045 = vunpack.c.l.b16 %v1006
        %v1046 = vunpack.c.l.b16 %v1007
        %v1047 = vunpack.c.l.b16 %v1008
        %v1048 = vunpack.c.l.b16 %v1009
        %v1049 = vpack.c.b16 %v1034, %v1033
        %v1050 = vpack.c.b16 %v1036, %v1035
        %v1051 = vpack.c.b16 %v1038, %v1037
        %v1052 = vpack.c.b16 %v1040, %v1039
        %v1053 = vpack.c.b16 %v1042, %v1041
        %v1054 = vpack.c.b16 %v1044, %v1043
        %v1055 = vpack.c.b16 %v1046, %v1045
        %v1056 = vpack.c.b16 %v1048, %v1047
        %1065 = vmatprep.subr.bf16.mxu0 0
        %1066 = vmatpush1.bf16.msra.mxu0 %v1049
        %1067 = vmatprep.subr.bf16.mxu0 0
        %1068 = vmatpush1.bf16.msra.mxu0 %v1050
        %1069 = vmatprep.subr.bf16.mxu0 0
        %1070 = vmatpush1.bf16.msra.mxu0 %v1051
        %1071 = vmatprep.subr.bf16.mxu0 0
        %1072 = vmatpush1.bf16.msra.mxu0 %v1052
        %1073 = vmatprep.subr.bf16.mxu0 0
        %1074 = vmatpush1.bf16.msra.mxu0 %v1053
        %1075 = vmatprep.subr.bf16.mxu0 0
        %1076 = vmatpush1.bf16.msra.mxu0 %v1054
        %1077 = vmatprep.subr.bf16.mxu0 0
        %1078 = vmatpush1.bf16.msra.mxu0 %v1055
        %1079 = vmatprep.subr.bf16.mxu0 0
        %1080 = vmatpush1.bf16.msra.mxu0 %v1056
        %1081 = vmatprep.subr.bf16.mxu0 0
        %1082 = vmatpush1.bf16.msra.mxu0 0
        %1083 = vmatprep.subr.bf16.mxu0 0
        %1084 = vmatpush1.bf16.msra.mxu0 0
        %1085 = vmatprep.subr.bf16.mxu0 0
        %1086 = vmatpush1.bf16.msra.mxu0 0
        %1087 = vmatprep.subr.bf16.mxu0 0
        %1088 = vmatpush1.bf16.msra.mxu0 0
        %1089 = vmatprep.subr.bf16.mxu0 0
        %1090 = vmatpush1.bf16.msra.mxu0 0
        %1091 = vmatprep.subr.bf16.mxu0 0
        %1092 = vmatpush1.bf16.msra.mxu0 0
        %1093 = vmatprep.subr.bf16.mxu0 0
        %1094 = vmatpush1.bf16.msra.mxu0 0
        %1095 = vmatprep.subr.bf16.mxu0 0
        %1096 = vmatpush1.bf16.msra.mxu0 0
        %1097 = vmatprep.mubr.bf16.mxu0 0
        %1098 = vmatmul.mubr.bf16.gmra.mrb[0].mxu0 %v990
        %v1099 = vpop.f32.mrb[0].mxu0
        %v1100 = vadd.f32 %v1015, %v1099
        %v1101 = vpop.f32.mrb[0].mxu0
        %v1102 = vpop.f32.mrb[0].mxu0
        %v1103 = vadd.f32 %v1015, %v1102
        %v1104 = vpop.f32.mrb[0].mxu0
        %1105 = vmatprep.mubr.bf16.mxu0 0
        %1106 = vmatmul.mubr.bf16.gmra.mrb[0].mxu0 %v991
        %v1107 = vpop.f32.mrb[0].mxu0
        %v1108 = vadd.f32 %v1015, %v1107
        %v1109 = vpop.f32.mrb[0].mxu0
        %v1110 = vpop.f32.mrb[0].mxu0
        %v1111 = vadd.f32 %v1015, %v1110
        %v1112 = vpop.f32.mrb[0].mxu0
        %1113 = vmatprep.mubr.bf16.mxu0 0
        %1114 = vmatmul.mubr.bf16.gmra.mrb[0].mxu0 %v992
        %v1115 = vpop.f32.mrb[0].mxu0
        %v1116 = vadd.f32 %v1015, %v1115
        %v1117 = vpop.f32.mrb[0].mxu0
        %v1118 = vpop.f32.mrb[0].mxu0
        %v1119 = vadd.f32 %v1015, %v1118
        %v1120 = vpop.f32.mrb[0].mxu0
        %1121 = vmatprep.mubr.bf16.mxu0 0
        %1122 = vmatmul.mubr.bf16.gmra.mrb[0].mxu0 %v993
        %v1123 = vpop.f32.mrb[0].mxu0
        %v1124 = vadd.f32 %v1015, %v1123
        %v1125 = vpop.f32.mrb[0].mxu0
        %v1126 = vpop.f32.mrb[0].mxu0
        %v1127 = vadd.f32 %v1015, %v1126
        %v1128 = vpop.f32.mrb[0].mxu0
        %1129 = vdwg.mxu0
        %v1130 = vadd.f32 %v1100, %v587
        %v1131 = vadd.f32 %v1103, %v588
        %v1132 = vadd.f32 %v1108, %v589
        %v1133 = vadd.f32 %v1111, %v590
        %v1134 = vadd.f32 %v1116, %v591
        %v1135 = vadd.f32 %v1119, %v592
        %v1136 = vadd.f32 %v1124, %v593
        %v1137 = vadd.f32 %v1127, %v594
        %1138 = vst [vmem:[%s370] sm:$0xff] %v1130
        %1139 = vst [vmem:[%s370 + $0x8] sm:$0xff] %v1131
        %1140 = vst [vmem:[%s370 + $0x10] sm:$0xff] %v1132
        %1141 = vst [vmem:[%s370 + $0x18] sm:$0xff] %v1133
        %1142 = vst [vmem:[%s370 + $0x20] sm:$0xff] %v1134
        %1143 = vst [vmem:[%s370 + $0x28] sm:$0xff] %v1135
        %1144 = vst [vmem:[%s370 + $0x30] sm:$0xff] %v1136
        %1145 = vst [vmem:[%s370 + $0x38] sm:$0xff] %v1137
        %s1146 = sand.u32 %s187, 1
        %s1147 = scalar_lea.sflag [#allocation6], %s1146
        %s1148 = sand.u32 %s187, 1
        %s1149 = smul.addr %s1148, 64
        %s1150 = scalar_lea.vmem [#allocation13], %s1149
        // Predicated region
        $region69: #{tpu_custom_call.1} parent=43 // pred_check
          %p1151 = pneg %p197
        $region70: #{tpu_custom_call.1} parent=43 // pred_check_branch
          %1153 = sbr.rel (%p1151) target = $region72
        $region71: #{tpu_custom_call.1} parent=43 // pred_region
          %s1154 = smul.u32 8, %s32
          %s1156 = ssub.s32 1024, 1024
          %1157 = vsyncadd %s1147, %s1156
          %s1158 = smul.addr %s31, 8
          %s1159 = sadd.s32 %s1154, %s1158
          %s1160 = smul.addr %s1159, 128
          %s1161 = scalar_lea.hbm %s6, %s1160
          %s1162 = sshll.u32 %s1150, 4
          %s1163 = int_to_ptr.vmem [resolvable:$true] %s1162
          %1168 = dma.vmem_to_hbm [thread:$0]  %s1163, 1024, %s1161, %s1147, 128, 128, 8
        $region72: #{tpu_custom_call.1} parent=43 // pred_fallthru
          _
      $region44: #{tpu_custom_call.1} parent=5 // pred_fallthru
        _
      %p1169 = scmp.le.s32.totalorder 2, %s22
      // Predicated region
      $region73: #{tpu_custom_call.1} parent=5 // pred_check
        %p1170 = pneg %p1169
      $region74: #{tpu_custom_call.1} parent=5 // pred_check_branch
        %1172 = sbr.rel (%p1170) target = $region76
      $region75: #{tpu_custom_call.1} parent=5 // pred_region
        %s1173 = ssub.s32 %s22, 2
        // Predicated region
        $region77: #{tpu_custom_call.1} parent=75 // pred_check
          %p1174 = pneg %p203
        $region78: #{tpu_custom_call.1} parent=75 // pred_check_branch
          %1176 = sbr.rel (%p1174) target = $region80
        $region79: #{tpu_custom_call.1} parent=75 // pred_region
          %s1177 = sand.u32 %s188, 1
          %s1178 = scalar_lea.sflag [#allocation6], %s1177
          %s1179 = sand.u32 %s188, 1
          %s1180 = smul.addr %s1179, 64
          %s1181 = scalar_lea.vmem [#allocation13], %s1180
          %1182 = dma.done %s1178, 1024
        $region80: #{tpu_custom_call.1} parent=75 // pred_fallthru
          _
      $region76: #{tpu_custom_call.1} parent=5 // pred_fallthru
        _
    $region6: #{tpu_custom_call.1} parent=1 // loop_footer
      %s26 = sadd.s32 1, %s22
    $region7: #{tpu_custom_call.1} parent=1 // loop_footer_branch
      %21 = sbr.rel target = $region3
    $region8: #{tpu_custom_call.1} parent=1 // loop_exit
      _
    %1183 = vsyncpa [#allocation5], 1
    %s1184 = scalar_lea.sflag [#allocation5], 1
    %1185 = vsyncpa %s1184, 1
    %1186 = vsyncpa [#allocation8], 1
    %s1187 = scalar_lea.sflag [#allocation8], 1
    %1188 = vsyncpa %s1187, 1
    %1189 = vsyncpa [#allocation11], 1
    %1190 = vsyncpa [#allocation6], 1
    %s1191 = scalar_lea.sflag [#allocation6], 1
    %1192 = vsyncpa %s1191, 1

</llo_original>
